<compile_context>
chip_gen: v6e
topology: v6e:2x2x1
jax: 0.10.0
libtpu: 0.0.40
codegen_flags: <defaults>
</compile_context>

<pallas_src>
import jax
import jax.numpy as jnp
from jax import lax
from jax.experimental import pallas as pl
from jax.experimental.pallas import tpu as pltpu

EPS = 1e-12                       # F.normalize default eps
_TARGET_BLOCK_BYTES = 4 << 20     # per-block input budget (~4 MiB)
_SPLIT_MIN_BYTES = 16 << 20       # only split for dual-TC when traffic >= this


def _normalize_kernel(scale_ref, x_ref, o_ref):
    # INVARIANT: rows are independent.  With a non-divisible grid the last
    # block's out-of-range rows hold unspecified data; their results are never
    # written back.  Do NOT add any cross-row reduction to this kernel.
    x = x_ref[...].astype(jnp.float32)
    sq_sum = jnp.sum(x * x, axis=1, keepdims=True)            # (tb, 1) lane reduce
    # 1 / max(||x||, eps) == rsqrt(max(sum(x^2), eps^2))  (sqrt is monotone)
    inv = lax.rsqrt(jnp.maximum(sq_sum, EPS * EPS))            # EUP, per-row only
    o_ref[...] = (x * (scale_ref[0] * inv)).astype(o_ref.dtype)  # one fused mul


def _sublane(dtype):
    return {4: 8, 2: 16, 1: 32}.get(jnp.dtype(dtype).itemsize, 8)


def _round_up(v, m):
    return ((v + m - 1) // m) * m


def _pick_row_tile(B, D, dtype):
    """Row tile: dtype-aware sublane multiple, block <= ~4 MiB, partial last block."""
    itemsize = jnp.dtype(dtype).itemsize
    sub = _sublane(dtype)
    if B < sub:
        return B  # block equal to the full array dim is always legal
    cap = max(sub, (_TARGET_BLOCK_BYTES // max(1, D * itemsize)) // sub * sub)
    tb = min(cap, (B // sub) * sub)

    # Size-gated dual-TensorCore split: only when each core still gets
    # multi-MiB blocks, and prefer an even grid so both TCs get equal work.
    total_bytes = 2 * B * D * itemsize
    if total_bytes >= _SPLIT_MIN_BYTES:
        if pl.cdiv(B, tb) < 2:
            tb = max(sub, _round_up(pl.cdiv(B, 2), sub))
        grid = pl.cdiv(B, tb)
        if grid > 1 and grid % 2 == 1:
            tb_even = max(sub, _round_up(pl.cdiv(B, grid + 1), sub))
            if pl.cdiv(B, tb_even) % 2 == 0:
                tb = tb_even
    return tb


def normalize_pallas(x, scale):
    """scale * L2-normalize(x, axis=1).  x: (B, D), scale: (1,)."""
    B, D = x.shape
    itemsize = jnp.dtype(x.dtype).itemsize

    # Lane-dense stores: for small D pad up to 128 with zeros (zeros don't
    # change sum(x^2), so the math is exact); larger D is left as-is.
    if D < 128:
        Dp = 128
        x_in = jnp.pad(x, ((0, 0), (0, Dp - D)))
    else:
        Dp = D
        x_in = x

    tb = _pick_row_tile(B, Dp, x.dtype)
    grid = pl.cdiv(B, tb)

    # VMEM budget: 2x double-buffered in/out blocks + f32 temporaries.
    block_bytes = tb * Dp * max(itemsize, 4)
    vmem_limit = int(min(64 << 20, max(48 << 20, 6 * block_bytes + (4 << 20))))
    # TODO(synk): for extreme D (a single (sublane, D) block >> VMEM) a
    # two-pass D-chunked reduction would be required; not implemented here.

    out = pl.pallas_call(
        _normalize_kernel,
        out_shape=jax.ShapeDtypeStruct((B, Dp), x.dtype),
        grid_spec=pltpu.PrefetchScalarGridSpec(
            num_scalar_prefetch=0,
            grid=(grid,),
            in_specs=[
                pl.BlockSpec(memory_space=pltpu.MemorySpace.SMEM),  # scale
                pl.BlockSpec((tb, Dp), lambda i: (i, 0)),           # x row tile
            ],
            out_specs=pl.BlockSpec((tb, Dp), lambda i: (i, 0)),
        ),
        compiler_params=pltpu.CompilerParams(
            dimension_semantics=("parallel",),
            vmem_limit_bytes=vmem_limit,
        ),
    )(scale, x_in)

    return out[:, :D] if Dp != D else out


def _reference(x, scale):
    xf = x.astype(jnp.float32)
    denom = jnp.maximum(jnp.sqrt(jnp.sum(xf * xf, axis=1, keepdims=True)), EPS)
    return (scale[0] * (xf / denom)).astype(x.dtype)


if __name__ == "__main__":
    key = jax.random.PRNGKey(0)
    scale = jnp.ones((1,), dtype=jnp.float32)   # torch.nn.Parameter(torch.ones(1))
    k0, k1, k2 = jax.random.split(key, 3)

    # Aligned case (single block).
    x0 = jax.random.normal(k0, (8, 128), dtype=jnp.float32)
    out0 = jax.block_until_ready(normalize_pallas(x0, scale))
    assert out0.shape == x0.shape and out0.dtype == x0.dtype
    assert jnp.allclose(out0, _reference(x0, scale), atol=1e-5, rtol=1e-5)

    # Ragged batch (partial last block, no pad/slice) + D<128 lane-padding path.
    x1 = jax.random.normal(k1, (10, 96), dtype=jnp.float32)
    out1 = jax.block_until_ready(normalize_pallas(x1, scale))
    assert out1.shape == x1.shape
    assert jnp.allclose(out1, _reference(x1, scale), atol=1e-5, rtol=1e-5)

    # bf16 input: dtype-aware sublane tiling (16) + ragged multi-step grid.
    x2 = jax.random.normal(k2, (24, 256), dtype=jnp.bfloat16)
    out2 = jax.block_until_ready(normalize_pallas(x2, scale))
    assert out2.shape == x2.shape and out2.dtype == jnp.bfloat16
    assert jnp.allclose(out2.astype(jnp.float32),
                        _reference(x2, scale).astype(jnp.float32),
                        atol=2e-2, rtol=2e-2)

    print("KERNEL_OK")
</pallas_src>

<mosaic_0001>
module attributes {stable_mosaic.version = 11 : i64} {
  func.func @_normalize_kernel(%arg0: i32, %arg1: memref<1xf32, #tpu.memory_space<smem>>, %arg2: memref<8x128xf32, #tpu.memory_space<vmem>>, %arg3: memref<8x128xf32, #tpu.memory_space<vmem>>) attributes {dimension_semantics = [#tpu.dimension_semantics<parallel>], iteration_bounds = array<i64: 1>, scalar_prefetch = 0 : i64, scratch_operands = 0 : i64, tpu.core_type = #tpu.core_type<tc>, window_params = [{transform_indices = @transform_0, window_bounds = array<i64: 1>}, {transform_indices = @transform_1, window_bounds = array<i64: 8, 128>}, {transform_indices = @transform_2, window_bounds = array<i64: 8, 128>}]} {
    %c0 = arith.constant 0 : index
    %c0_0 = arith.constant 0 : index
    %0 = vector.load %arg2[%c0, %c0_0] : memref<8x128xf32, #tpu.memory_space<vmem>>, vector<8x128xf32>
    %1 = arith.mulf %0, %0 : vector<8x128xf32>
    %cst = arith.constant dense<0.000000e+00> : vector<8xf32>
    %2 = vector.multi_reduction <add>, %1, %cst [1] : vector<8x128xf32> to vector<8xf32>
    %3 = vector.shape_cast %2 : vector<8xf32> to vector<8x1xf32>
    %cst_1 = arith.constant 1.000000e-24 : f32
    %4 = vector.broadcast %cst_1 : f32 to vector<8x1xf32>
    %5 = arith.maximumf %3, %4 : vector<8x1xf32>
    %6 = math.rsqrt %5 : vector<8x1xf32>
    %c0_2 = arith.constant 0 : index
    %7 = memref.load %arg1[%c0_2] : memref<1xf32, #tpu.memory_space<smem>>
    %8 = vector.broadcast %7 : f32 to vector<8x1xf32>
    %9 = arith.mulf %8, %6 : vector<8x1xf32>
    %10 = vector.broadcast %9 : vector<8x1xf32> to vector<8x128xf32>
    %11 = arith.mulf %0, %10 : vector<8x128xf32>
    %c0_3 = arith.constant 0 : index
    %c0_4 = arith.constant 0 : index
    %12 = vector.load %arg3[%c0_3, %c0_4] : memref<8x128xf32, #tpu.memory_space<vmem>>, vector<8x128xf32>
    tpu.vector_store %arg3[%c0_3, %c0_4], %11 {strides = array<i32>} : memref<8x128xf32, #tpu.memory_space<vmem>>, vector<8x128xf32>,
    return
  }
  func.func @transform_0(%arg0: i32) -> i32 {
    %c0_i32 = arith.constant 0 : i32
    %c0_i32_0 = arith.constant 0 : i32
    return %c0_i32 : i32
  }
  func.func @transform_1(%arg0: i32) -> (i32, i32) {
    %c0_i32 = arith.constant 0 : i32
    %c0_i32_0 = arith.constant 0 : i32
    return %arg0, %c0_i32 : i32, i32
  }
  func.func @transform_2(%arg0: i32) -> (i32, i32) {
    %c0_i32 = arith.constant 0 : i32
    %c0_i32_0 = arith.constant 0 : i32
    return %arg0, %c0_i32 : i32, i32
  }
}

</mosaic_0001>

<llo_original>
// kernel: tpu_custom_call.1
$region0: #{tpu_custom_call.1}
  #allocation0 [shape = 'u32[]', space=smem, size = 0x4, offset = 0x4, fixed_abs, tag = 'smem constant byte address 0x4 - core index']
  #allocation1 [shape = 'u32[144,128]{1,0:T(1,128)}', space=vmem, size = 0x12000, scoped, tag = 'internal scratch']
  #allocation2 [shape = 'f32[1]{0:T(128)S(6)}', space=smem, size = 0x200, scoped, tag = 'scoped memory for tpu_custom_call.1']
  %s0 = inlined_call_operand.<no memory space> [shape: f32[1], index: 0, kind: input, shape index: {}]
  %s1 = inlined_call_operand.hbm [shape: f32[8,128], index: 1, kind: input, shape index: {}]
  %s2 = inlined_call_operand.hbm [shape: f32[8,128], index: 2, kind: output, shape index: {}]
  %s3 = sld [smem:[#allocation0]]
  $region22: #{tpu_custom_call.1} parent=0
    _
  %s5 = ssub.s32 1, %s3
  %s6 = scalar_select 0, %s5, %s3
  %7 = sst [smem:[#allocation2]] %s0
  $region1: #{tpu_custom_call.1} parent=0
    #allocation3 [shape = 'u8[4096]{0}', space=vmem, size = 0x1000, scoped, tag = 'input window, operand 1, single buffered']
    #allocation4 [shape = 's32[1]{0}', space=sflag, size = 0x4, scoped, tag = 'scoped memory for tpu_custom_call.1']
    #allocation5 [shape = 's32[1]{0}', space=sflag, size = 0x4, scoped, tag = 'scoped memory for tpu_custom_call.1']
    #allocation6 [shape = 'u8[4096]{0}', space=vmem, size = 0x1000, scoped, tag = 'output window, operand 0, single buffered']
    %8 = vsyncpa [#allocation4], 0
    %9 = vsyncpa [#allocation5], 0
    // Predicated region
    $region2: #{tpu_custom_call.1} parent=1 // pred_check
      _
    $region3: #{tpu_custom_call.1} parent=1 // pred_check_branch
      %11 = sbr.rel (0) target = $region5
    $region4: #{tpu_custom_call.1} parent=1 // pred_region
      _
    $region5: #{tpu_custom_call.1} parent=1 // pred_fallthru
      _
    // Predicated region
    $region6: #{tpu_custom_call.1} parent=1 // pred_check
      _
    $region7: #{tpu_custom_call.1} parent=1 // pred_check_branch
      %13 = sbr.rel (0) target = $region9
    $region8: #{tpu_custom_call.1} parent=1 // pred_region
      %s15 = ssub.s32 128, 128
      %16 = vsyncadd [#allocation4], %s15
      %s18 = sshll.u32 [#allocation3], 4
      %s19 = int_to_ptr.vmem [resolvable:$true] %s18
      %21 = dma.hbm_to_vmem [thread:$0]  %s1, 128, %s19, [#allocation4]
    $region9: #{tpu_custom_call.1} parent=1 // pred_fallthru
      _
    // Predicated region
    $region10: #{tpu_custom_call.1} parent=1 // pred_check
      _
    $region11: #{tpu_custom_call.1} parent=1 // pred_check_branch
      %23 = sbr.rel (0) target = $region13
    $region12: #{tpu_custom_call.1} parent=1 // pred_region
      %24 = dma.done [#allocation4], 128
    $region13: #{tpu_custom_call.1} parent=1 // pred_fallthru
      _
    %v25 = vld [vmem:[#allocation3] sm:$0xff]
    %v26 = vmul.f32 %v25, %v25
    %27 = vadd.xlane.f32.xlu0 %v26
    %v28 = vpop.xlane.xlu0 %27
    %v29 = vmax.f32 %v28, 1e-24
    %v30 = vrsqrt.pop %v29
    %s31 = sld [smem:[#allocation2]]
    %v32 = vstv %s31
    %v33 = vmul.f32 %v32, %v30
    %v34 = vmul.f32 %v25, %v33
    %35 = vst [vmem:[#allocation6] sm:$0xff] %v34
    // Predicated region
    $region14: #{tpu_custom_call.1} parent=1 // pred_check
      _
    $region15: #{tpu_custom_call.1} parent=1 // pred_check_branch
      %37 = sbr.rel (0) target = $region17
    $region16: #{tpu_custom_call.1} parent=1 // pred_region
      %s39 = ssub.s32 128, 128
      %40 = vsyncadd [#allocation5], %s39
      %s42 = sshll.u32 [#allocation6], 4
      %s43 = int_to_ptr.vmem [resolvable:$true] %s42
      %45 = dma.vmem_to_hbm [thread:$0]  %s43, 128, %s2, [#allocation5]
    $region17: #{tpu_custom_call.1} parent=1 // pred_fallthru
      _
    // Predicated region
    $region18: #{tpu_custom_call.1} parent=1 // pred_check
      _
    $region19: #{tpu_custom_call.1} parent=1 // pred_check_branch
      %47 = sbr.rel (0) target = $region21
    $region20: #{tpu_custom_call.1} parent=1 // pred_region
      %48 = dma.done [#allocation5], 128
    $region21: #{tpu_custom_call.1} parent=1 // pred_fallthru
      _
    %49 = vsyncpa [#allocation4], 1
    %50 = vsyncpa [#allocation5], 1

</llo_original>
